<compile_context>
chip_gen: v5e
topology: v5e:2x2
jax: 0.10.0
libtpu: 0.0.40
codegen_flags: <defaults>
</compile_context>

<pallas_src>
import functools

import jax
import jax.numpy as jnp
from jax.experimental import pallas as pl
from jax.experimental.pallas import tpu as pltpu

KSIZE = 3  # conv kernel width (padding = 1 -> "same" length)


# ---------------------------------------------------------------------------
# Fused kernel: all conv blocks + mean + fused (fc_mu | fc_logvar) head.
# ---------------------------------------------------------------------------
def _make_encoder_kernel(num_conv):
    """Builds the fused kernel for a static number of conv blocks."""

    def kernel(x_ref, *refs):
        # refs = (w0, b0, w1, b1, ..., w_head, b_head, out_ref)
        conv_refs = refs[: 2 * num_conv]
        wh_ref, bh_ref, out_ref = refs[2 * num_conv:]

        h = x_ref[...]                                          # (TB, L, C0) bf16
        TB, L, _ = h.shape

        for layer in range(num_conv):                           # static unroll
            w_ref = conv_refs[2 * layer]                        # (K, Cin, Cout) bf16
            b = conv_refs[2 * layer + 1][...]                   # (1, Cout) f32
            Cout = w_ref.shape[2]

            dot = functools.partial(
                jax.lax.dot_general,
                dimension_numbers=(((2,), (0,)), ((), ())),
                preferred_element_type=jnp.float32)

            # Centre tap: y[l] += h[l] @ w1
            acc = dot(h, w_ref[1])                              # (TB, L, Cout) f32

            l_idx = jax.lax.broadcasted_iota(jnp.int32, (TB, L, Cout), 1)

            # Left tap:  y[l] += h[l-1] @ w0  -> roll partial output down by 1,
            # zero the wrapped row 0 (conv "same" zero padding).
            t0 = pltpu.roll(dot(h, w_ref[0]), shift=1, axis=1)
            acc = acc + jnp.where(l_idx == 0, 0.0, t0)

            # Right tap: y[l] += h[l+1] @ w2  -> roll partial output up by 1
            # (circular shift L-1), zero the wrapped row L-1.
            t2 = pltpu.roll(dot(h, w_ref[2]), shift=L - 1, axis=1)
            acc = acc + jnp.where(l_idx == L - 1, 0.0, t2)

            acc = jnp.maximum(acc + b, 0.0)                     # bias + ReLU (f32)
            h = acc.astype(jnp.bfloat16)                        # bf16 between layers

        # mean over L: 1/L is folded into the head weight, so only a sum here.
        s = jnp.sum(h.astype(jnp.float32), axis=1)              # (TB, C)
        out = jnp.dot(s, wh_ref[...], preferred_element_type=jnp.float32)
        out_ref[...] = (out + bh_ref[...]).astype(out_ref.dtype)

    return kernel


# ---------------------------------------------------------------------------
# Batch-tile heuristic: VMEM-budgeted, 8-sublane aligned, >=2 grid steps.
# ---------------------------------------------------------------------------
def _pick_batch_tile(B, L, c0, conv_dims, z):
    dims = conv_dims if conv_dims else [(c0, c0)]
    # Live per-batch-row bytes at the widest layer: bf16 activation input +
    # (up to) 3 f32 per-tap partial outputs / accumulator.
    act_row = max(L * (cin * 2 + 3 * cout * 4) for cin, cout in dims)
    row_bytes = act_row + 2 * (L * c0 * 2) + 2 * (2 * z * 4)    # + dbl-buf x + out
    w_bytes = sum(2 * (KSIZE * cin * cout * 2 + cout * 4) for cin, cout in dims)
    w_bytes += 2 * (dims[-1][1] * 2 * z + 2 * z) * 4            # head (f32)
    budget = 40 * 1024 * 1024                                   # fits v7x 64 MiB VMEM

    tb = max(8, (budget - w_bytes) // max(row_bytes, 1))
    if B >= 16:
        # Guarantee >=2 grid steps (v7x second TC, double-buffered DMA overlap).
        half = -(-B // 2)
        tb = min(tb, ((half + 7) // 8) * 8)
    tb = min(tb, B)
    if tb < B:
        tb = max(8, (tb // 8) * 8)                              # 8-sublane aligned tile
    return int(tb)


# ---------------------------------------------------------------------------
# Wrapper: weight packing + pallas_call plumbing (batch-tiled grid).
# ---------------------------------------------------------------------------
@jax.jit
def vae_encoder_forward(x, params):
    """Full VaeEncoder forward. x: (B, L, C_in) -> (mu, logvar)."""
    B, L, C0 = x.shape
    num_conv = len(params["conv"])

    x_bf = x.astype(jnp.bfloat16)                               # halve HBM read of x

    conv_args, conv_dims = [], []
    for (w, b) in params["conv"]:
        K, Cin, Cout = w.shape
        conv_dims.append((Cin, Cout))
        conv_args.append(w.astype(jnp.bfloat16))                # (K, Cin, Cout) bf16
        conv_args.append(b.reshape(1, Cout))                    # (1, Cout) f32

    Z = params["w_mu"].shape[1]
    C_last = params["w_mu"].shape[0]
    # Fuse fc_mu / fc_logvar into one (C, 2Z) matmul; fold the mean's 1/L in.
    w_head = jnp.concatenate([params["w_mu"], params["w_lv"]], axis=1) * (1.0 / L)
    b_head = jnp.concatenate([params["b_mu"], params["b_lv"]]).reshape(1, 2 * Z)

    TB = _pick_batch_tile(B, L, C0, conv_dims, Z)
    grid = (pl.cdiv(B, TB),)

    in_specs = [pl.BlockSpec((TB, L, C0), lambda i: (i, 0, 0))]
    for a in conv_args + [w_head, b_head]:
        in_specs.append(
            pl.BlockSpec(a.shape, lambda i, nd=a.ndim: (0,) * nd))   # resident
    out_spec = pl.BlockSpec((TB, 2 * Z), lambda i: (i, 0))

    flops = 2 * B * L * sum(KSIZE * cin * cout for cin, cout in conv_dims)
    flops += 2 * B * C_last * 2 * Z
    bytes_accessed = (B * L * C0 * 2
                      + sum(KSIZE * cin * cout * 2 + cout * 4
                            for cin, cout in conv_dims)
                      + (C_last * 2 * Z + 2 * Z) * 4
                      + B * 2 * Z * 4)

    y = pl.pallas_call(
        _make_encoder_kernel(num_conv),
        out_shape=jax.ShapeDtypeStruct((B, 2 * Z), x.dtype),
        grid=grid,
        in_specs=in_specs,
        out_specs=out_spec,
        compiler_params=pltpu.CompilerParams(
            dimension_semantics=("parallel",),          # megacore / v7x 2-TC split
            vmem_limit_bytes=48 * 1024 * 1024),
        cost_estimate=pl.CostEstimate(
            flops=flops, transcendentals=0, bytes_accessed=bytes_accessed),
    )(x_bf, *conv_args, w_head, b_head)

    return y[:, :Z], y[:, Z:]


# ---------------------------------------------------------------------------
# Deterministic parameter init (shapes follow the nn.Module __init__).
#  - conv weight stored as (K, Cin, Cout)  == torch (Cout, Cin, K).transpose(2,1,0)
#  - linear weight stored as (C, Z)        == torch (Z, C).T
# ---------------------------------------------------------------------------
def init_params(key, layer_sizes):
    params = {"conv": []}
    for cin, cout in zip(layer_sizes[:-2], layer_sizes[1:-1]):
        key, kw, kb = jax.random.split(key, 3)
        bound = 1.0 / jnp.sqrt(cin * KSIZE)
        w = jax.random.uniform(kw, (KSIZE, cin, cout), jnp.float32, -bound, bound)
        b = jax.random.uniform(kb, (cout,), jnp.float32, -bound, bound)
        params["conv"].append((w, b))
    c, z = layer_sizes[-2], layer_sizes[-1]
    bound = 1.0 / jnp.sqrt(c)
    key, k1, k2, k3, k4 = jax.random.split(key, 5)
    params["w_mu"] = jax.random.uniform(k1, (c, z), jnp.float32, -bound, bound)
    params["b_mu"] = jax.random.uniform(k2, (z,), jnp.float32, -bound, bound)
    params["w_lv"] = jax.random.uniform(k3, (c, z), jnp.float32, -bound, bound)
    params["b_lv"] = jax.random.uniform(k4, (z,), jnp.float32, -bound, bound)
    return params


# Pure-JAX f32 reference (matches the PyTorch forward semantics).
def _reference_forward(x, params):
    h = x
    for (w, b) in params["conv"]:
        B, L, _ = h.shape
        hpad = jnp.pad(h, ((0, 0), (1, 1), (0, 0)))
        acc = sum(jnp.einsum("blc,cd->bld", hpad[:, k:k + L, :], w[k])
                  for k in range(KSIZE)) + b
        h = jnp.maximum(acc, 0.0)
    m = h.mean(axis=1)
    return m @ params["w_mu"] + params["b_mu"], m @ params["w_lv"] + params["b_lv"]


if __name__ == "__main__":
    layer_sizes = [4, 8, 16, 8]   # conv: 4->8, 8->16 ; fc_mu/fc_logvar: 16->8
    B, L = 2, 16

    root = jax.random.PRNGKey(0)
    kx, kp = jax.random.split(root)
    x = jax.random.normal(kx, (B, L, layer_sizes[0]), jnp.float32)
    params = init_params(kp, layer_sizes)

    mu, logvar = vae_encoder_forward(x, params)
    jax.block_until_ready((mu, logvar))

    assert mu.shape == (B, layer_sizes[-1]) and logvar.shape == (B, layer_sizes[-1])

    # bf16 MXU path between layers -> loosened tolerance vs the f32 reference.
    mu_ref, lv_ref = _reference_forward(x, params)
    assert jnp.allclose(mu, mu_ref, atol=5e-2, rtol=5e-2)
    assert jnp.allclose(logvar, lv_ref, atol=5e-2, rtol=5e-2)

    print("KERNEL_OK")
</pallas_src>

<mosaic_0001>
module attributes {stable_mosaic.version = 11 : i64} {
  func.func @kernel(%arg0: i32, %arg1: memref<2x16x4xbf16, #tpu.memory_space<vmem>>, %arg2: memref<3x4x8xbf16, #tpu.memory_space<vmem>>, %arg3: memref<1x8xf32, #tpu.memory_space<vmem>>, %arg4: memref<3x8x16xbf16, #tpu.memory_space<vmem>>, %arg5: memref<1x16xf32, #tpu.memory_space<vmem>>, %arg6: memref<16x16xf32, #tpu.memory_space<vmem>>, %arg7: memref<1x16xf32, #tpu.memory_space<vmem>>, %arg8: memref<2x16xf32, #tpu.memory_space<vmem>>) attributes {dimension_semantics = [#tpu.dimension_semantics<parallel>], iteration_bounds = array<i64: 1>, scalar_prefetch = 0 : i64, scratch_operands = 0 : i64, tpu.core_type = #tpu.core_type<tc>, window_params = [{transform_indices = @transform_0, window_bounds = array<i64: 2, 16, 4>}, {pipeline_mode = #tpu.pipeline_mode<synchronous>, transform_indices = @transform_1, window_bounds = array<i64: 3, 4, 8>}, {pipeline_mode = #tpu.pipeline_mode<synchronous>, transform_indices = @transform_2, window_bounds = array<i64: 1, 8>}, {pipeline_mode = #tpu.pipeline_mode<synchronous>, transform_indices = @transform_3, window_bounds = array<i64: 3, 8, 16>}, {pipeline_mode = #tpu.pipeline_mode<synchronous>, transform_indices = @transform_4, window_bounds = array<i64: 1, 16>}, {pipeline_mode = #tpu.pipeline_mode<synchronous>, transform_indices = @transform_5, window_bounds = array<i64: 16, 16>}, {pipeline_mode = #tpu.pipeline_mode<synchronous>, transform_indices = @transform_6, window_bounds = array<i64: 1, 16>}, {transform_indices = @transform_7, window_bounds = array<i64: 2, 16>}]} {
    %c0 = arith.constant 0 : index
    %c0_0 = arith.constant 0 : index
    %c0_1 = arith.constant 0 : index
    %0 = vector.load %arg1[%c0, %c0_0, %c0_1] : memref<2x16x4xbf16, #tpu.memory_space<vmem>>, vector<2x16x4xbf16>
    %c0_2 = arith.constant 0 : index
    %c0_3 = arith.constant 0 : index
    %1 = vector.load %arg3[%c0_2, %c0_3] : memref<1x8xf32, #tpu.memory_space<vmem>>, vector<1x8xf32>
    %c1 = arith.constant 1 : index
    %c0_4 = arith.constant 0 : index
    %c0_5 = arith.constant 0 : index
    %2 = vector.load %arg2[%c1, %c0_4, %c0_5] : memref<3x4x8xbf16, #tpu.memory_space<vmem>>, vector<1x4x8xbf16>
    %3 = vector.shape_cast %2 : vector<1x4x8xbf16> to vector<4x8xbf16>
    %cst = arith.constant dense<0.000000e+00> : vector<2x16x8xf32>
    %4 = tpu.matmul %0, %3, %cst {dimension_numbers = #tpu.dot_dimension_numbers<[2], [0], [0, 1], [1], [0, 0, 0, 1, 1, 1], [], []>} : vector<2x16x4xbf16>, vector<4x8xbf16>, vector<2x16x8xf32> -> vector<2x16x8xf32>
    %5 = tpu.iota {dimensions = array<i32: 1>} : vector<2x16x8xi32>
    %c0_6 = arith.constant 0 : index
    %c0_7 = arith.constant 0 : index
    %c0_8 = arith.constant 0 : index
    %6 = vector.load %arg2[%c0_6, %c0_7, %c0_8] : memref<3x4x8xbf16, #tpu.memory_space<vmem>>, vector<1x4x8xbf16>
    %7 = vector.shape_cast %6 : vector<1x4x8xbf16> to vector<4x8xbf16>
    %cst_9 = arith.constant dense<0.000000e+00> : vector<2x16x8xf32>
    %8 = tpu.matmul %0, %7, %cst_9 {dimension_numbers = #tpu.dot_dimension_numbers<[2], [0], [0, 1], [1], [0, 0, 0, 1, 1, 1], [], []>} : vector<2x16x4xbf16>, vector<4x8xbf16>, vector<2x16x8xf32> -> vector<2x16x8xf32>
    %c1_i32 = arith.constant 1 : i32
    %9 = tpu.dynamic_rotate %8 by %c1_i32 dim 1 : vector<2x16x8xf32>, i32 -> vector<2x16x8xf32>
    %c0_i32 = arith.constant 0 : i32
    %10 = vector.broadcast %c0_i32 : i32 to vector<2x16x8xi32>
    %11 = arith.cmpi eq, %5, %10 : vector<2x16x8xi32>
    %cst_10 = arith.constant 0.000000e+00 : f32
    %12 = vector.broadcast %cst_10 : f32 to vector<2x16x8xf32>
    %13 = arith.select %11, %12, %9 : vector<2x16x8xi1>, vector<2x16x8xf32>
    %14 = arith.addf %4, %13 : vector<2x16x8xf32>
    %c2 = arith.constant 2 : index
    %c0_11 = arith.constant 0 : index
    %c0_12 = arith.constant 0 : index
    %15 = vector.load %arg2[%c2, %c0_11, %c0_12] : memref<3x4x8xbf16, #tpu.memory_space<vmem>>, vector<1x4x8xbf16>
    %16 = vector.shape_cast %15 : vector<1x4x8xbf16> to vector<4x8xbf16>
    %cst_13 = arith.constant dense<0.000000e+00> : vector<2x16x8xf32>
    %17 = tpu.matmul %0, %16, %cst_13 {dimension_numbers = #tpu.dot_dimension_numbers<[2], [0], [0, 1], [1], [0, 0, 0, 1, 1, 1], [], []>} : vector<2x16x4xbf16>, vector<4x8xbf16>, vector<2x16x8xf32> -> vector<2x16x8xf32>
    %c15_i32 = arith.constant 15 : i32
    %18 = tpu.dynamic_rotate %17 by %c15_i32 dim 1 : vector<2x16x8xf32>, i32 -> vector<2x16x8xf32>
    %c15_i32_14 = arith.constant 15 : i32
    %19 = vector.broadcast %c15_i32_14 : i32 to vector<2x16x8xi32>
    %20 = arith.cmpi eq, %5, %19 : vector<2x16x8xi32>
    %cst_15 = arith.constant 0.000000e+00 : f32
    %21 = vector.broadcast %cst_15 : f32 to vector<2x16x8xf32>
    %22 = arith.select %20, %21, %18 : vector<2x16x8xi1>, vector<2x16x8xf32>
    %23 = arith.addf %14, %22 : vector<2x16x8xf32>
    %24 = vector.shape_cast %1 : vector<1x8xf32> to vector<1x1x8xf32>
    %25 = vector.broadcast %24 : vector<1x1x8xf32> to vector<2x16x8xf32>
    %26 = arith.addf %23, %25 : vector<2x16x8xf32>
    %cst_16 = arith.constant 0.000000e+00 : f32
    %27 = vector.broadcast %cst_16 : f32 to vector<2x16x8xf32>
    %28 = arith.maximumf %26, %27 : vector<2x16x8xf32>
    %29 = arith.truncf %28 : vector<2x16x8xf32> to vector<2x16x8xbf16>
    %c0_17 = arith.constant 0 : index
    %c0_18 = arith.constant 0 : index
    %30 = vector.load %arg5[%c0_17, %c0_18] : memref<1x16xf32, #tpu.memory_space<vmem>>, vector<1x16xf32>
    %c1_19 = arith.constant 1 : index
    %c0_20 = arith.constant 0 : index
    %c0_21 = arith.constant 0 : index
    %31 = vector.load %arg4[%c1_19, %c0_20, %c0_21] : memref<3x8x16xbf16, #tpu.memory_space<vmem>>, vector<1x8x16xbf16>
    %32 = vector.shape_cast %31 : vector<1x8x16xbf16> to vector<8x16xbf16>
    %cst_22 = arith.constant dense<0.000000e+00> : vector<2x16x16xf32>
    %33 = tpu.matmul %29, %32, %cst_22 {dimension_numbers = #tpu.dot_dimension_numbers<[2], [0], [0, 1], [1], [0, 0, 0, 1, 1, 1], [], []>} : vector<2x16x8xbf16>, vector<8x16xbf16>, vector<2x16x16xf32> -> vector<2x16x16xf32>
    %34 = tpu.iota {dimensions = array<i32: 1>} : vector<2x16x16xi32>
    %c0_23 = arith.constant 0 : index
    %c0_24 = arith.constant 0 : index
    %c0_25 = arith.constant 0 : index
    %35 = vector.load %arg4[%c0_23, %c0_24, %c0_25] : memref<3x8x16xbf16, #tpu.memory_space<vmem>>, vector<1x8x16xbf16>
    %36 = vector.shape_cast %35 : vector<1x8x16xbf16> to vector<8x16xbf16>
    %cst_26 = arith.constant dense<0.000000e+00> : vector<2x16x16xf32>
    %37 = tpu.matmul %29, %36, %cst_26 {dimension_numbers = #tpu.dot_dimension_numbers<[2], [0], [0, 1], [1], [0, 0, 0, 1, 1, 1], [], []>} : vector<2x16x8xbf16>, vector<8x16xbf16>, vector<2x16x16xf32> -> vector<2x16x16xf32>
    %c1_i32_27 = arith.constant 1 : i32
    %38 = tpu.dynamic_rotate %37 by %c1_i32_27 dim 1 : vector<2x16x16xf32>, i32 -> vector<2x16x16xf32>
    %c0_i32_28 = arith.constant 0 : i32
    %39 = vector.broadcast %c0_i32_28 : i32 to vector<2x16x16xi32>
    %40 = arith.cmpi eq, %34, %39 : vector<2x16x16xi32>
    %cst_29 = arith.constant 0.000000e+00 : f32
    %41 = vector.broadcast %cst_29 : f32 to vector<2x16x16xf32>
    %42 = arith.select %40, %41, %38 : vector<2x16x16xi1>, vector<2x16x16xf32>
    %43 = arith.addf %33, %42 : vector<2x16x16xf32>
    %c2_30 = arith.constant 2 : index
    %c0_31 = arith.constant 0 : index
    %c0_32 = arith.constant 0 : index
    %44 = vector.load %arg4[%c2_30, %c0_31, %c0_32] : memref<3x8x16xbf16, #tpu.memory_space<vmem>>, vector<1x8x16xbf16>
    %45 = vector.shape_cast %44 : vector<1x8x16xbf16> to vector<8x16xbf16>
    %cst_33 = arith.constant dense<0.000000e+00> : vector<2x16x16xf32>
    %46 = tpu.matmul %29, %45, %cst_33 {dimension_numbers = #tpu.dot_dimension_numbers<[2], [0], [0, 1], [1], [0, 0, 0, 1, 1, 1], [], []>} : vector<2x16x8xbf16>, vector<8x16xbf16>, vector<2x16x16xf32> -> vector<2x16x16xf32>
    %c15_i32_34 = arith.constant 15 : i32
    %47 = tpu.dynamic_rotate %46 by %c15_i32_34 dim 1 : vector<2x16x16xf32>, i32 -> vector<2x16x16xf32>
    %c15_i32_35 = arith.constant 15 : i32
    %48 = vector.broadcast %c15_i32_35 : i32 to vector<2x16x16xi32>
    %49 = arith.cmpi eq, %34, %48 : vector<2x16x16xi32>
    %cst_36 = arith.constant 0.000000e+00 : f32
    %50 = vector.broadcast %cst_36 : f32 to vector<2x16x16xf32>
    %51 = arith.select %49, %50, %47 : vector<2x16x16xi1>, vector<2x16x16xf32>
    %52 = arith.addf %43, %51 : vector<2x16x16xf32>
    %53 = vector.shape_cast %30 : vector<1x16xf32> to vector<1x1x16xf32>
    %54 = vector.broadcast %53 : vector<1x1x16xf32> to vector<2x16x16xf32>
    %55 = arith.addf %52, %54 : vector<2x16x16xf32>
    %cst_37 = arith.constant 0.000000e+00 : f32
    %56 = vector.broadcast %cst_37 : f32 to vector<2x16x16xf32>
    %57 = arith.maximumf %55, %56 : vector<2x16x16xf32>
    %58 = arith.truncf %57 : vector<2x16x16xf32> to vector<2x16x16xbf16>
    %59 = arith.extf %58 : vector<2x16x16xbf16> to vector<2x16x16xf32>
    %cst_38 = arith.constant dense<0.000000e+00> : vector<2x16xf32>
    %60 = vector.multi_reduction <add>, %59, %cst_38 [1] : vector<2x16x16xf32> to vector<2x16xf32>
    %c0_39 = arith.constant 0 : index
    %c0_40 = arith.constant 0 : index
    %61 = vector.load %arg6[%c0_39, %c0_40] : memref<16x16xf32, #tpu.memory_space<vmem>>, vector<16x16xf32>
    %cst_41 = arith.constant dense<0.000000e+00> : vector<2x16xf32>
    %62 = tpu.matmul %60, %61, %cst_41 {dimension_numbers = #tpu.dot_dimension_numbers<[1], [0], [0], [1], [0, 0, 1, 1], [], []>} : vector<2x16xf32>, vector<16x16xf32>, vector<2x16xf32> -> vector<2x16xf32>
    %c0_42 = arith.constant 0 : index
    %c0_43 = arith.constant 0 : index
    %63 = vector.load %arg7[%c0_42, %c0_43] : memref<1x16xf32, #tpu.memory_space<vmem>>, vector<1x16xf32>
    %64 = vector.broadcast %63 : vector<1x16xf32> to vector<2x16xf32>
    %65 = arith.addf %62, %64 : vector<2x16xf32>
    %c0_44 = arith.constant 0 : index
    %c0_45 = arith.constant 0 : index
    %66 = vector.load %arg8[%c0_44, %c0_45] : memref<2x16xf32, #tpu.memory_space<vmem>>, vector<2x16xf32>
    tpu.vector_store %arg8[%c0_44, %c0_45], %65 {strides = array<i32>} : memref<2x16xf32, #tpu.memory_space<vmem>>, vector<2x16xf32>,
    return
  }
  func.func @transform_0(%arg0: i32) -> (i32, i32, i32) {
    %c0_i32 = arith.constant 0 : i32
    %c0_i32_0 = arith.constant 0 : i32
    %c0_i32_1 = arith.constant 0 : i32
    return %arg0, %c0_i32, %c0_i32_0 : i32, i32, i32
  }
  func.func @transform_1(%arg0: i32) -> (i32, i32, i32) {
    %c0_i32 = arith.constant 0 : i32
    %c0_i32_0 = arith.constant 0 : i32
    %c0_i32_1 = arith.constant 0 : i32
    %c0_i32_2 = arith.constant 0 : i32
    return %c0_i32, %c0_i32_0, %c0_i32_1 : i32, i32, i32
  }
  func.func @transform_2(%arg0: i32) -> (i32, i32) {
    %c0_i32 = arith.constant 0 : i32
    %c0_i32_0 = arith.constant 0 : i32
    %c0_i32_1 = arith.constant 0 : i32
    return %c0_i32, %c0_i32_0 : i32, i32
  }
  func.func @transform_3(%arg0: i32) -> (i32, i32, i32) {
    %c0_i32 = arith.constant 0 : i32
    %c0_i32_0 = arith.constant 0 : i32
    %c0_i32_1 = arith.constant 0 : i32
    %c0_i32_2 = arith.constant 0 : i32
    return %c0_i32, %c0_i32_0, %c0_i32_1 : i32, i32, i32
  }
  func.func @transform_4(%arg0: i32) -> (i32, i32) {
    %c0_i32 = arith.constant 0 : i32
    %c0_i32_0 = arith.constant 0 : i32
    %c0_i32_1 = arith.constant 0 : i32
    return %c0_i32, %c0_i32_0 : i32, i32
  }
  func.func @transform_5(%arg0: i32) -> (i32, i32) {
    %c0_i32 = arith.constant 0 : i32
    %c0_i32_0 = arith.constant 0 : i32
    %c0_i32_1 = arith.constant 0 : i32
    return %c0_i32, %c0_i32_0 : i32, i32
  }
  func.func @transform_6(%arg0: i32) -> (i32, i32) {
    %c0_i32 = arith.constant 0 : i32
    %c0_i32_0 = arith.constant 0 : i32
    %c0_i32_1 = arith.constant 0 : i32
    return %c0_i32, %c0_i32_0 : i32, i32
  }
  func.func @transform_7(%arg0: i32) -> (i32, i32) {
    %c0_i32 = arith.constant 0 : i32
    %c0_i32_0 = arith.constant 0 : i32
    return %arg0, %c0_i32 : i32, i32
  }
}

</mosaic_0001>

<llo_original>
// kernel: vae_encoder_forward.1
$region0: #{vae_encoder_forward.1}
  #allocation0 [shape = 'u32[]', space=smem, size = 0x4, offset = 0x4, fixed_abs, tag = 'smem constant byte address 0x4 - core index']
  #allocation1 [shape = 'u32[72,128]{1,0:T(1,128)}', space=vmem, size = 0x9000, scoped, tag = 'internal scratch']
  %s0 = inlined_call_operand.vmem [shape: bf16[2,16,4], index: 0, kind: input, shape index: {}]
  %s1 = inlined_call_operand.vmem [shape: bf16[3,4,8], index: 1, kind: input, shape index: {}]
  %s2 = inlined_call_operand.vmem [shape: f32[1,8], index: 2, kind: input, shape index: {}]
  %s3 = inlined_call_operand.vmem [shape: bf16[3,8,16], index: 3, kind: input, shape index: {}]
  %s4 = inlined_call_operand.vmem [shape: f32[1,16], index: 4, kind: input, shape index: {}]
  %s5 = inlined_call_operand.vmem [shape: f32[16,16], index: 5, kind: input, shape index: {}]
  %s6 = inlined_call_operand.vmem [shape: f32[1,16], index: 6, kind: input, shape index: {}]
  %s7 = inlined_call_operand.vmem [shape: f32[2,16], index: 7, kind: output, shape index: {}]
  %s8 = sld [smem:[#allocation0]]
  $region38: #{vae_encoder_forward.1} parent=0
    _
  %s10 = ssub.s32 1, %s8
  %s11 = scalar_select 0, %s10, %s8
  // Predicated region
  $region2: #{vae_encoder_forward.1} parent=0 // pred_check
    _
  $region3: #{vae_encoder_forward.1} parent=0 // pred_check_branch
    %13 = sbr.rel (0) target = $region5
  $region4: #{vae_encoder_forward.1} parent=0 // pred_region
    _
  $region5: #{vae_encoder_forward.1} parent=0 // pred_fallthru
    _
  // Predicated region
  $region6: #{vae_encoder_forward.1} parent=0 // pred_check
    _
  $region7: #{vae_encoder_forward.1} parent=0 // pred_check_branch
    %15 = sbr.rel (0) target = $region9
  $region8: #{vae_encoder_forward.1} parent=0 // pred_region
    _
  $region9: #{vae_encoder_forward.1} parent=0 // pred_fallthru
    _
  // Predicated region
  $region10: #{vae_encoder_forward.1} parent=0 // pred_check
    _
  $region11: #{vae_encoder_forward.1} parent=0 // pred_check_branch
    %17 = sbr.rel (0) target = $region13
  $region12: #{vae_encoder_forward.1} parent=0 // pred_region
    _
  $region13: #{vae_encoder_forward.1} parent=0 // pred_fallthru
    _
  // Predicated region
  $region14: #{vae_encoder_forward.1} parent=0 // pred_check
    _
  $region15: #{vae_encoder_forward.1} parent=0 // pred_check_branch
    %19 = sbr.rel (0) target = $region17
  $region16: #{vae_encoder_forward.1} parent=0 // pred_region
    _
  $region17: #{vae_encoder_forward.1} parent=0 // pred_fallthru
    _
  // Predicated region
  $region18: #{vae_encoder_forward.1} parent=0 // pred_check
    _
  $region19: #{vae_encoder_forward.1} parent=0 // pred_check_branch
    %21 = sbr.rel (0) target = $region21
  $region20: #{vae_encoder_forward.1} parent=0 // pred_region
    _
  $region21: #{vae_encoder_forward.1} parent=0 // pred_fallthru
    _
  // Predicated region
  $region22: #{vae_encoder_forward.1} parent=0 // pred_check
    _
  $region23: #{vae_encoder_forward.1} parent=0 // pred_check_branch
    %23 = sbr.rel (0) target = $region25
  $region24: #{vae_encoder_forward.1} parent=0 // pred_region
    _
  $region25: #{vae_encoder_forward.1} parent=0 // pred_fallthru
    _
  // Predicated region
  $region26: #{vae_encoder_forward.1} parent=0 // pred_check
    _
  $region27: #{vae_encoder_forward.1} parent=0 // pred_check_branch
    %25 = sbr.rel (0) target = $region29
  $region28: #{vae_encoder_forward.1} parent=0 // pred_region
    _
  $region29: #{vae_encoder_forward.1} parent=0 // pred_fallthru
    _
  %v27 = vld [vmem:[%s0] sm:$0xf]
  %v28 = vld [vmem:[%s0 + $0x4] sm:$0xf]
  %v29 = vld [vmem:[%s0 + $0x8] sm:$0xf]
  %v30 = vld [vmem:[%s0 + $0xc] sm:$0xf]
  %v31 = vld [vmem:[%s2] sm:$0x1]
  %s32 = scalar_lea.vmem %s1, 2
  %v33 = vld [vmem:[%s32] sm:$0x3]
  %v34 = vlaneseq
  %v35 = vshrl.u32 %v34, 7
  %v36 = vadd.s32 %v35, 8
  %v37 = vld [vmem:[%s1] sm:$0x3]
  %v42 = vunpack.c.l.b16 %v27
  %v43 = vunpack.c.l.b16 %v28
  %v44 = vunpack.c.l.b16 %v29
  %v45 = vunpack.c.l.b16 %v30
  %v46 = vpack.c.b16 %v43, %v42
  %v47 = vpack.c.b16 %v45, %v44
  %vm48 = vcmask 31744
  %v50 = vsel %vm48, %v46, 0
  %v53 = vsel %vm48, %v47, 0
  %vm55 = vcmask 1041408
  %v57 = vsel %vm55, %v37, 0
  %59 = vmatpush.bf16.msra.mxu0 0
  %60 = vmatpush.bf16.msra.mxu0 0
  %61 = vmatpush.bf16.msra.mxu0 0
  %62 = vmatpush.bf16.msra.mxu0 0
  %63 = vmatpush.bf16.msra.mxu0 0
  %64 = vmatpush.bf16.msra.mxu0 0
  %65 = vmatpush.bf16.msra.mxu0 0
  %66 = vmatpush.bf16.msra.mxu0 %v57
  %67 = vmatmul.bf16.gmra.mxu0 %v50
  %v68 = vpop.f32.mrf.mxu0
  %v69 = vadd.f32 0.0, %v68
  %v70 = vpop.f32.mrf.mxu0
  %v71 = vadd.f32 0.0, %v70
  %72 = vmatmul.bf16.gmra.mxu0 %v53
  %v73 = vpop.f32.mrf.mxu0
  %v74 = vadd.f32 0.0, %v73
  %v75 = vpop.f32.mrf.mxu0
  %v76 = vadd.f32 0.0, %v75
  %77 = vdwg.mxu0
  %v78 = vrot.slane %v69, 7
  %v79 = vrot.slane %v74, 7
  %v80 = vrot.slane %v71, 7
  %v81 = vrot.slane %v76, 7
  %vm82 = vcmp.lt.s32.totalorder %v35, 1
  %v83 = vsel %vm82, %v78, %v80
  %v84 = vsel %vm82, %v79, %v81
  %v85 = vsel %vm82, %v80, %v78
  %v86 = vsel %vm82, %v81, %v79
  %vm87 = vcmp.eq.s32.totalorder %v35, 0
  %vm88 = vcmp.eq.s32.totalorder %v36, 0
  %v89 = vsel %vm87, 0.0, %v85
  %v90 = vsel %vm88, 0.0, %v83
  %v91 = vsel %vm87, 0.0, %v86
  %v92 = vsel %vm88, 0.0, %v84
  %v94 = vsel %vm55, %v33, 0
  %96 = vmatpush.bf16.msra.mxu0 0
  %97 = vmatpush.bf16.msra.mxu0 0
  %98 = vmatpush.bf16.msra.mxu0 0
  %99 = vmatpush.bf16.msra.mxu0 0
  %100 = vmatpush.bf16.msra.mxu0 0
  %101 = vmatpush.bf16.msra.mxu0 0
  %102 = vmatpush.bf16.msra.mxu0 0
  %103 = vmatpush.bf16.msra.mxu0 %v94
  %104 = vmatmul.bf16.gmra.mxu0 %v50
  %v105 = vpop.f32.mrf.mxu0
  %v106 = vadd.f32 %v89, %v105
  %v107 = vpop.f32.mrf.mxu0
  %v108 = vadd.f32 %v90, %v107
  %109 = vmatmul.bf16.gmra.mxu0 %v53
  %v110 = vpop.f32.mrf.mxu0
  %v111 = vadd.f32 %v91, %v110
  %v112 = vpop.f32.mrf.mxu0
  %v113 = vadd.f32 %v92, %v112
  %114 = vdwg.mxu0
  %s115 = scalar_lea.vmem %s1, 4
  %v116 = vld [vmem:[%s115] sm:$0x3]
  %v118 = vsel %vm55, %v116, 0
  %120 = vmatpush.bf16.msra.mxu0 0
  %121 = vmatpush.bf16.msra.mxu0 0
  %122 = vmatpush.bf16.msra.mxu0 0
  %123 = vmatpush.bf16.msra.mxu0 0
  %124 = vmatpush.bf16.msra.mxu0 0
  %125 = vmatpush.bf16.msra.mxu0 0
  %126 = vmatpush.bf16.msra.mxu0 0
  %127 = vmatpush.bf16.msra.mxu0 %v118
  %128 = vmatmul.bf16.gmra.mxu0 %v50
  %v129 = vpop.f32.mrf.mxu0
  %v130 = vadd.f32 0.0, %v129
  %v131 = vpop.f32.mrf.mxu0
  %v132 = vadd.f32 0.0, %v131
  %133 = vmatmul.bf16.gmra.mxu0 %v53
  %v134 = vpop.f32.mrf.mxu0
  %v135 = vadd.f32 0.0, %v134
  %v136 = vpop.f32.mrf.mxu0
  %v137 = vadd.f32 0.0, %v136
  %138 = vdwg.mxu0
  %v139 = vrot.slane %v130, 1
  %v140 = vrot.slane %v135, 1
  %v141 = vrot.slane %v132, 1
  %v142 = vrot.slane %v137, 1
  %vm143 = vcmp.lt.s32.totalorder %v35, 7
  %v144 = vsel %vm143, %v139, %v141
  %v145 = vsel %vm143, %v140, %v142
  %v146 = vsel %vm143, %v141, %v139
  %v147 = vsel %vm143, %v142, %v140
  %vm148 = vcmp.eq.s32.totalorder %v35, 15
  %vm149 = vcmp.eq.s32.totalorder %v36, 15
  %v150 = vsel %vm148, 0.0, %v144
  %v151 = vsel %vm149, 0.0, %v146
  %v152 = vsel %vm148, 0.0, %v145
  %v153 = vsel %vm149, 0.0, %v147
  %v154 = vadd.f32 %v106, %v150
  %v155 = vadd.f32 %v108, %v151
  %v156 = vadd.f32 %v111, %v152
  %v157 = vadd.f32 %v113, %v153
  %v159 = vperm.slane %v31, 0
  %v161 = vadd.f32 %v154, %v159
  %v162 = vadd.f32 %v155, %v159
  %v163 = vadd.f32 %v156, %v159
  %v164 = vadd.f32 %v157, %v159
  %v165 = vmax.f32 %v161, 0.0
  %v166 = vmax.f32 %v162, 0.0
  %v167 = vmax.f32 %v163, 0.0
  %v168 = vmax.f32 %v164, 0.0
  %v169 = vpack.c.bf16 %v165, %v165
  %v170 = vpack.c.bf16 %v166, %v166
  %v171 = vpack.c.bf16 %v167, %v167
  %v172 = vpack.c.bf16 %v168, %v168
  %v173 = vld [vmem:[%s4] sm:$0x1]
  %s174 = scalar_lea.vmem %s3, 4
  %v175 = vld [vmem:[%s174] sm:$0xf]
  %v176 = vld [vmem:[%s3] sm:$0xf]
  %v181 = vunpack.c.l.b16 %v169
  %v182 = vunpack.c.l.b16 %v170
  %v183 = vunpack.c.l.b16 %v171
  %v184 = vunpack.c.l.b16 %v172
  %v185 = vpack.c.b16 %v182, %v181
  %v186 = vpack.c.b16 %v184, %v183
  %vm187 = vcmask 64512
  %v189 = vsel %vm187, %v185, 0
  %v192 = vsel %vm187, %v186, 0
  %vm194 = vcmask 1043456
  %v196 = vsel %vm194, %v176, 0
  %198 = vmatpush.bf16.msra.mxu0 0
  %199 = vmatpush.bf16.msra.mxu0 0
  %200 = vmatpush.bf16.msra.mxu0 0
  %201 = vmatpush.bf16.msra.mxu0 0
  %202 = vmatpush.bf16.msra.mxu0 0
  %203 = vmatpush.bf16.msra.mxu0 0
  %204 = vmatpush.bf16.msra.mxu0 0
  %205 = vmatpush.bf16.msra.mxu0 %v196
  %206 = vmatmul.bf16.gmra.mxu0 %v189
  %v207 = vpop.f32.mrf.mxu0
  %v208 = vadd.f32 0.0, %v207
  %v209 = vpop.f32.mrf.mxu0
  %v210 = vadd.f32 0.0, %v209
  %211 = vmatmul.bf16.gmra.mxu0 %v192
  %v212 = vpop.f32.mrf.mxu0
  %v213 = vadd.f32 0.0, %v212
  %v214 = vpop.f32.mrf.mxu0
  %v215 = vadd.f32 0.0, %v214
  %216 = vdwg.mxu0
  %v217 = vrot.slane %v208, 7
  %v218 = vrot.slane %v213, 7
  %v219 = vrot.slane %v210, 7
  %v220 = vrot.slane %v215, 7
  %v221 = vsel %vm82, %v217, %v219
  %v222 = vsel %vm82, %v218, %v220
  %v223 = vsel %vm82, %v219, %v217
  %v224 = vsel %vm82, %v220, %v218
  %v225 = vsel %vm87, 0.0, %v223
  %v226 = vsel %vm88, 0.0, %v221
  %v227 = vsel %vm87, 0.0, %v224
  %v228 = vsel %vm88, 0.0, %v222
  %v230 = vsel %vm194, %v175, 0
  %232 = vmatpush.bf16.msra.mxu0 0
  %233 = vmatpush.bf16.msra.mxu0 0
  %234 = vmatpush.bf16.msra.mxu0 0
  %235 = vmatpush.bf16.msra.mxu0 0
  %236 = vmatpush.bf16.msra.mxu0 0
  %237 = vmatpush.bf16.msra.mxu0 0
  %238 = vmatpush.bf16.msra.mxu0 0
  %239 = vmatpush.bf16.msra.mxu0 %v230
  %240 = vmatmul.bf16.gmra.mxu0 %v189
  %v241 = vpop.f32.mrf.mxu0
  %v242 = vadd.f32 %v225, %v241
  %v243 = vpop.f32.mrf.mxu0
  %v244 = vadd.f32 %v226, %v243
  %245 = vmatmul.bf16.gmra.mxu0 %v192
  %v246 = vpop.f32.mrf.mxu0
  %v247 = vadd.f32 %v227, %v246
  %v248 = vpop.f32.mrf.mxu0
  %v249 = vadd.f32 %v228, %v248
  %250 = vdwg.mxu0
  %s251 = scalar_lea.vmem %s3, 8
  %v252 = vld [vmem:[%s251] sm:$0xf]
  %v254 = vsel %vm194, %v252, 0
  %256 = vmatpush.bf16.msra.mxu0 0
  %257 = vmatpush.bf16.msra.mxu0 0
  %258 = vmatpush.bf16.msra.mxu0 0
  %259 = vmatpush.bf16.msra.mxu0 0
  %260 = vmatpush.bf16.msra.mxu0 0
  %261 = vmatpush.bf16.msra.mxu0 0
  %262 = vmatpush.bf16.msra.mxu0 0
  %263 = vmatpush.bf16.msra.mxu0 %v254
  %264 = vmatmul.bf16.gmra.mxu0 %v189
  %v265 = vpop.f32.mrf.mxu0
  %v266 = vadd.f32 0.0, %v265
  %v267 = vpop.f32.mrf.mxu0
  %v268 = vadd.f32 0.0, %v267
  %269 = vmatmul.bf16.gmra.mxu0 %v192
  %v270 = vpop.f32.mrf.mxu0
  %v271 = vadd.f32 0.0, %v270
  %v272 = vpop.f32.mrf.mxu0
  %v273 = vadd.f32 0.0, %v272
  %274 = vdwg.mxu0
  %v275 = vrot.slane %v266, 1
  %v276 = vrot.slane %v271, 1
  %v277 = vrot.slane %v268, 1
  %v278 = vrot.slane %v273, 1
  %v279 = vsel %vm143, %v275, %v277
  %v280 = vsel %vm143, %v276, %v278
  %v281 = vsel %vm143, %v277, %v275
  %v282 = vsel %vm143, %v278, %v276
  %v283 = vsel %vm148, 0.0, %v279
  %v284 = vsel %vm149, 0.0, %v281
  %v285 = vsel %vm148, 0.0, %v280
  %v286 = vsel %vm149, 0.0, %v282
  %v287 = vadd.f32 %v242, %v283
  %v288 = vadd.f32 %v244, %v284
  %v289 = vadd.f32 %v247, %v285
  %v290 = vadd.f32 %v249, %v286
  %v292 = vperm.slane %v173, 0
  %v294 = vadd.f32 %v287, %v292
  %v295 = vadd.f32 %v288, %v292
  %v296 = vadd.f32 %v289, %v292
  %v297 = vadd.f32 %v290, %v292
  %v298 = vmax.f32 %v294, 0.0
  %v299 = vmax.f32 %v295, 0.0
  %v300 = vmax.f32 %v296, 0.0
  %v301 = vmax.f32 %v297, 0.0
  %v302 = vpack.c.bf16 %v299, %v298
  %v303 = vpack.c.bf16 %v301, %v300
  %v304 = vunpack.c.l.bf16 %v302
  %v305 = vunpack.c.h.bf16 %v302
  %v306 = vunpack.c.l.bf16 %v303
  %v307 = vunpack.c.h.bf16 %v303
  %vm308 = vcmask 130048
  %v309 = vsel %vm308, %v304, 0.0
  %v310 = vsel %vm308, %v305, 0.0
  %v311 = vadd.f32 %v309, %v310
  %v312 = vrot.slane %v311, 4
  %v313 = vadd.f32 %v311, %v312
  %v314 = vrot.slane %v313, 2
  %v315 = vadd.f32 %v313, %v314
  %v316 = vrot.slane %v315, 1
  %v317 = vadd.f32 %v315, %v316
  %v318 = vsel %vm308, %v306, 0.0
  %v319 = vsel %vm308, %v307, 0.0
  %v320 = vadd.f32 %v318, %v319
  %v321 = vrot.slane %v320, 4
  %v322 = vadd.f32 %v320, %v321
  %v323 = vrot.slane %v322, 2
  %v324 = vadd.f32 %v322, %v323
  %v325 = vrot.slane %v324, 1
  %v326 = vadd.f32 %v324, %v325
  %v327 = vld [vmem:[%s5] sm:$0xff]
  %v328 = vld [vmem:[%s5 + $0x8] sm:$0xff]
  %v329 = vld [vmem:[%s6] sm:$0x1]
  %v331 = vperm.slane %v329, 0
  %vm335 = vcmask 1041409
  %v336 = vsel %vm335, %v326, %v317
  %v337 = vsel %vm308, %v336, 0
  %339 = vmatpush.msra.mxu0 0.0
  %340 = vmatpush.msra.mxu0 0.0
  %341 = vmatpush.msra.mxu0 0.0
  %342 = vmatpush.msra.mxu0 0.0
  %343 = vmatpush.msra.mxu0 0.0
  %344 = vmatpush.msra.mxu0 0.0
  %345 = vmatpush.msra.mxu0 0.0
  %346 = vmatpush.msra.mxu0 0.0
  %347 = vmatpush.msra.mxu0 0.0
  %348 = vmatpush.msra.mxu0 0.0
  %349 = vmatpush.msra.mxu0 0.0
  %350 = vmatpush.msra.mxu0 0.0
  %351 = vmatpush.msra.mxu0 0.0
  %352 = vmatpush.msra.mxu0 0.0
  %353 = vmatpush.msra.mxu0 %v328
  %354 = vmatpush.msra.mxu0 %v327
  %355 = vmatmul.f32.gmra.mxu0 %v337
  %v356 = vpop.f32.mrf.mxu0
  %v357 = vadd.f32 %v331, %v356
  %358 = vdwg.mxu0
  %vm359 = vcmask 123904
  %360 = vst.msk [vmem:[%s7] sm:$0x3] %vm359, %v357
  // Predicated region
  $region30: #{vae_encoder_forward.1} parent=0 // pred_check
    _
  $region31: #{vae_encoder_forward.1} parent=0 // pred_check_branch
    %362 = sbr.rel (0) target = $region33
  $region32: #{vae_encoder_forward.1} parent=0 // pred_region
    _
  $region33: #{vae_encoder_forward.1} parent=0 // pred_fallthru
    _
  // Predicated region
  $region34: #{vae_encoder_forward.1} parent=0 // pred_check
    _
  $region35: #{vae_encoder_forward.1} parent=0 // pred_check_branch
    %364 = sbr.rel (0) target = $region37
  $region36: #{vae_encoder_forward.1} parent=0 // pred_region
    _
  $region37: #{vae_encoder_forward.1} parent=0 // pred_fallthru
    _

</llo_original>
